<compile_context>
chip_gen: v7x
topology: tpu7x:2x2x1
jax: 0.10.0
libtpu: 0.0.40
codegen_flags: <defaults>
</compile_context>

<pallas_src>
import functools

import jax
import jax.numpy as jnp
from jax.experimental import pallas as pl
from jax.experimental.pallas import tpu as pltpu


def _round_up(n, m):
    return ((n + m - 1) // m) * m


def _block_diag(w, n):
    """[a, b] -> [n*a, n*b] block-diagonal with n copies of w on the diagonal."""
    if n == 1:
        return w
    a, b = w.shape
    eye = jnp.eye(n, dtype=w.dtype)
    return (eye[:, None, :, None] * w[None, :, None, :]).reshape(n * a, n * b)


def _replicator_kernel(x_ref, w1_ref, b1_ref, w2_ref, b2_ref, ones_ref,
                       skip_ref, o_ref):
    # Hoist the SMEM scalar read once, off the vector critical path.
    s = skip_ref[0]

    x = x_ref[...].astype(jnp.float32)                         # [TBp, P*D]
    # ShallowMLP fitness, packed form: block-diagonal replicated weights make
    # both Linear layers full-width (K = P*D, P*H) MXU matmuls.
    h = jnp.tanh(
        jnp.dot(x, w1_ref[...], preferred_element_type=jnp.float32) + b1_ref[...]
    )                                                          # [TBp, P*H]
    f = jnp.dot(h, w2_ref[...], preferred_element_type=jnp.float32) + b2_ref[...]
    # phi_i = sum_j x_j f_j per ORIGINAL row: the block-diagonal all-ones matmul
    # sums each D-lane segment and broadcasts the sum back within that segment.
    phi = jnp.dot(x * f, ones_ref[...], preferred_element_type=jnp.float32)
    # Replicator dynamics: dx = x * (f - phi) + skip * f  (strictly per row).
    o_ref[...] = (x * (f - phi) + s * f).astype(o_ref.dtype)


@functools.partial(jax.jit, static_argnames=("block_b",))
def replicator_shallow_mlp(t, x, params, *, block_b=4096):
    """x: [B, D]. Returns dx/dt with identical shape and dtype.

    block_b: original rows per grid step (rounded to the packed sublane grain).
    Large values (2048-4096) amortize per-step overhead; the tile is additionally
    capped so the grid keeps >=4 steps when the batch allows it (v7x 2-TC balance).
    """
    del t  # autonomous dynamics; t is unused by the ShallowMLP fitness
    w1, b1, w2, b2, skip = params
    B, D = x.shape
    H = w1.shape[1]
    assert w1.shape == (D, H) and w2.shape == (H, D)
    out_dtype = x.dtype

    # Lane packing factor: pack `n_pack` original rows into one 128-lane row.
    n_pack = 128 // D if (D < 128 and 128 % D == 0) else 1
    lanes = n_pack * D

    # Pad B to a multiple of n_pack (at most n_pack-1 zero rows; per-row
    # dynamics, so padded rows never pollute real rows and are sliced away).
    b_pad = _round_up(B, n_pack)
    if b_pad != B:
        x = jnp.pad(x, ((0, b_pad - B), (0, 0)))
    bp = b_pad // n_pack
    xp = x.reshape(bp, lanes)            # free: contiguous reinterpretation

    # Block-diagonal replicated weights / biases (tiny; VMEM-resident below).
    w1_blk = _block_diag(w1.astype(jnp.float32), n_pack)          # [P*D, P*H]
    w2_blk = _block_diag(w2.astype(jnp.float32), n_pack)          # [P*H, P*D]
    b1_blk = jnp.tile(b1.reshape(1, H).astype(jnp.float32), (1, n_pack))
    b2_blk = jnp.tile(b2.reshape(1, D).astype(jnp.float32), (1, n_pack))
    ones_blk = _block_diag(jnp.ones((D, D), jnp.float32), n_pack)  # [P*D, P*D]
    skip = skip.reshape(1).astype(jnp.float32)

    # Packed-row tile size: multiple of 8 sublanes, capped so the grid keeps
    # >=4 steps for megacore balance; a single full-extent block for tiny B.
    desired = max(8, _round_up(max(1, block_b // n_pack), 8))
    cap = max(8, _round_up(pl.cdiv(bp, 4), 8))
    tbp = min(desired, cap)
    if tbp >= bp:
        tbp = bp                          # single block == full array dim (legal)
    n_blocks = pl.cdiv(bp, tbp)           # partial last block handled by Pallas

    out = pl.pallas_call(
        _replicator_kernel,
        out_shape=jax.ShapeDtypeStruct((bp, lanes), out_dtype),
        grid=(n_blocks,),
        in_specs=[
            pl.BlockSpec((tbp, lanes), lambda i: (i, 0)),            # x, streamed
            pl.BlockSpec((lanes, n_pack * H), lambda i: (0, 0)),     # W1_blk
            pl.BlockSpec((1, n_pack * H), lambda i: (0, 0)),         # b1_blk
            pl.BlockSpec((n_pack * H, lanes), lambda i: (0, 0)),     # W2_blk
            pl.BlockSpec((1, lanes), lambda i: (0, 0)),              # b2_blk
            pl.BlockSpec((lanes, lanes), lambda i: (0, 0)),          # ones_blk
            pl.BlockSpec(memory_space=pltpu.MemorySpace.SMEM),       # skip (1,)
        ],
        out_specs=pl.BlockSpec((tbp, lanes), lambda i: (i, 0)),
        compiler_params=pltpu.CompilerParams(
            dimension_semantics=("parallel",),   # 2-TC sharding on v7x
            vmem_limit_bytes=32 * 1024 * 1024,   # explicit; usage is a few MiB
        ),
    )(xp, w1_blk, b1_blk, w2_blk, b2_blk, ones_blk, skip)

    out = out.reshape(b_pad, D)
    return out[:B] if b_pad != B else out


def init_params(key, data_dim, hidden_dim):
    """Deterministic PyTorch-Linear-style init: U(-1/sqrt(fan_in), 1/sqrt(fan_in))."""
    k1, k2, k3, k4 = jax.random.split(key, 4)
    s1 = 1.0 / jnp.sqrt(data_dim)
    s2 = 1.0 / jnp.sqrt(hidden_dim)
    w1 = jax.random.uniform(k1, (data_dim, hidden_dim), jnp.float32, -s1, s1)
    b1 = jax.random.uniform(k2, (1, hidden_dim), jnp.float32, -s1, s1)
    w2 = jax.random.uniform(k3, (hidden_dim, data_dim), jnp.float32, -s2, s2)
    b2 = jax.random.uniform(k4, (1, data_dim), jnp.float32, -s2, s2)
    skip = jnp.ones((1,), jnp.float32)   # learnable_skip scalar, init = 1.0
    return (w1, b1, w2, b2, skip)


def _reference(t, x, params):
    del t
    w1, b1, w2, b2, skip = params
    f = jnp.tanh(x @ w1 + b1) @ w2 + b2
    phi = jnp.sum(x * f, axis=-1, keepdims=True)
    return x * (f - phi) + skip[0] * f


if __name__ == "__main__":
    D, H = 16, 32   # data_dim, hidden_dim

    key = jax.random.PRNGKey(0)
    k_x1, k_x2, k_p = jax.random.split(key, 3)
    params = init_params(k_p, D, H)
    t = jnp.float32(0.0)

    # Case 1: multi-tile batch -> exercises the packed, pipelined grid (>=4 steps).
    B1 = 512
    x1 = jax.nn.softmax(jax.random.normal(k_x1, (B1, D), jnp.float32), axis=-1)
    out1 = jax.block_until_ready(replicator_shallow_mlp(t, x1, params))
    ref1 = _reference(t, x1, params)
    assert out1.shape == (B1, D) and out1.dtype == jnp.float32
    assert jnp.allclose(out1, ref1, atol=1e-5, rtol=1e-5)

    # Case 2: tiny, non-pack-aligned batch -> exercises the small-pad + slice path.
    B2 = 10
    x2 = jax.nn.softmax(jax.random.normal(k_x2, (B2, D), jnp.float32), axis=-1)
    out2 = jax.block_until_ready(replicator_shallow_mlp(t, x2, params))
    ref2 = _reference(t, x2, params)
    assert out2.shape == (B2, D) and out2.dtype == jnp.float32
    assert jnp.allclose(out2, ref2, atol=1e-5, rtol=1e-5)

    # Case 3: batch that is a multiple of 8 but not of the tile -> partial last
    # block masked by Pallas (no pad/slice round-trip).
    B3 = 600
    x3 = jax.nn.softmax(jax.random.normal(k_x1, (B3, D), jnp.float32), axis=-1)
    out3 = jax.block_until_ready(replicator_shallow_mlp(t, x3, params, block_b=256))
    ref3 = _reference(t, x3, params)
    assert out3.shape == (B3, D) and out3.dtype == jnp.float32
    assert jnp.allclose(out3, ref3, atol=1e-5, rtol=1e-5)

    print("KERNEL_OK")
</pallas_src>

<mosaic_0001>
module attributes {stable_mosaic.version = 11 : i64} {
  func.func @_replicator_kernel(%arg0: i32, %arg1: memref<16x128xf32, #tpu.memory_space<vmem>>, %arg2: memref<128x256xf32, #tpu.memory_space<vmem>>, %arg3: memref<1x256xf32, #tpu.memory_space<vmem>>, %arg4: memref<256x128xf32, #tpu.memory_space<vmem>>, %arg5: memref<1x128xf32, #tpu.memory_space<vmem>>, %arg6: memref<128x128xf32, #tpu.memory_space<vmem>>, %arg7: memref<1xf32, #tpu.memory_space<smem>>, %arg8: memref<16x128xf32, #tpu.memory_space<vmem>>) attributes {dimension_semantics = [#tpu.dimension_semantics<parallel>], iteration_bounds = array<i64: 4>, scalar_prefetch = 0 : i64, scratch_operands = 0 : i64, tpu.core_type = #tpu.core_type<tc>, window_params = [{transform_indices = @transform_0, window_bounds = array<i64: 16, 128>}, {pipeline_mode = #tpu.pipeline_mode<synchronous>, transform_indices = @transform_1, window_bounds = array<i64: 128, 256>}, {pipeline_mode = #tpu.pipeline_mode<synchronous>, transform_indices = @transform_2, window_bounds = array<i64: 1, 256>}, {pipeline_mode = #tpu.pipeline_mode<synchronous>, transform_indices = @transform_3, window_bounds = array<i64: 256, 128>}, {pipeline_mode = #tpu.pipeline_mode<synchronous>, transform_indices = @transform_4, window_bounds = array<i64: 1, 128>}, {pipeline_mode = #tpu.pipeline_mode<synchronous>, transform_indices = @transform_5, window_bounds = array<i64: 128, 128>}, {transform_indices = @transform_6, window_bounds = array<i64: 1>}, {transform_indices = @transform_7, window_bounds = array<i64: 16, 128>}]} {
    %c0 = arith.constant 0 : index
    %0 = memref.load %arg7[%c0] : memref<1xf32, #tpu.memory_space<smem>>
    %c0_0 = arith.constant 0 : index
    %c0_1 = arith.constant 0 : index
    %1 = vector.load %arg1[%c0_0, %c0_1] : memref<16x128xf32, #tpu.memory_space<vmem>>, vector<16x128xf32>
    %c0_2 = arith.constant 0 : index
    %c0_3 = arith.constant 0 : index
    %2 = vector.load %arg2[%c0_2, %c0_3] : memref<128x256xf32, #tpu.memory_space<vmem>>, vector<128x256xf32>
    %cst = arith.constant dense<0.000000e+00> : vector<16x256xf32>
    %3 = tpu.matmul %1, %2, %cst {dimension_numbers = #tpu.dot_dimension_numbers<[1], [0], [0], [1], [0, 0, 1, 1], [], []>} : vector<16x128xf32>, vector<128x256xf32>, vector<16x256xf32> -> vector<16x256xf32>
    %c0_4 = arith.constant 0 : index
    %c0_5 = arith.constant 0 : index
    %4 = vector.load %arg3[%c0_4, %c0_5] : memref<1x256xf32, #tpu.memory_space<vmem>>, vector<1x256xf32>
    %5 = vector.broadcast %4 : vector<1x256xf32> to vector<16x256xf32>
    %6 = arith.addf %3, %5 : vector<16x256xf32>
    %7 = math.tanh %6 : vector<16x256xf32>
    %c0_6 = arith.constant 0 : index
    %c0_7 = arith.constant 0 : index
    %8 = vector.load %arg4[%c0_6, %c0_7] : memref<256x128xf32, #tpu.memory_space<vmem>>, vector<256x128xf32>
    %cst_8 = arith.constant dense<0.000000e+00> : vector<16x128xf32>
    %9 = tpu.matmul %7, %8, %cst_8 {dimension_numbers = #tpu.dot_dimension_numbers<[1], [0], [0], [1], [0, 0, 1, 1], [], []>} : vector<16x256xf32>, vector<256x128xf32>, vector<16x128xf32> -> vector<16x128xf32>
    %c0_9 = arith.constant 0 : index
    %c0_10 = arith.constant 0 : index
    %10 = vector.load %arg5[%c0_9, %c0_10] : memref<1x128xf32, #tpu.memory_space<vmem>>, vector<1x128xf32>
    %11 = vector.broadcast %10 : vector<1x128xf32> to vector<16x128xf32>
    %12 = arith.addf %9, %11 : vector<16x128xf32>
    %13 = arith.mulf %1, %12 : vector<16x128xf32>
    %c0_11 = arith.constant 0 : index
    %c0_12 = arith.constant 0 : index
    %14 = vector.load %arg6[%c0_11, %c0_12] : memref<128x128xf32, #tpu.memory_space<vmem>>, vector<128x128xf32>
    %cst_13 = arith.constant dense<0.000000e+00> : vector<16x128xf32>
    %15 = tpu.matmul %13, %14, %cst_13 {dimension_numbers = #tpu.dot_dimension_numbers<[1], [0], [0], [1], [0, 0, 1, 1], [], []>} : vector<16x128xf32>, vector<128x128xf32>, vector<16x128xf32> -> vector<16x128xf32>
    %16 = arith.subf %12, %15 : vector<16x128xf32>
    %17 = arith.mulf %1, %16 : vector<16x128xf32>
    %18 = vector.broadcast %0 : f32 to vector<16x128xf32>
    %19 = arith.mulf %18, %12 : vector<16x128xf32>
    %20 = arith.addf %17, %19 : vector<16x128xf32>
    %c0_14 = arith.constant 0 : index
    %c0_15 = arith.constant 0 : index
    %21 = vector.load %arg8[%c0_14, %c0_15] : memref<16x128xf32, #tpu.memory_space<vmem>>, vector<16x128xf32>
    tpu.vector_store %arg8[%c0_14, %c0_15], %20 {strides = array<i32>} : memref<16x128xf32, #tpu.memory_space<vmem>>, vector<16x128xf32>,
    return
  }
  func.func @transform_0(%arg0: i32) -> (i32, i32) {
    %c0_i32 = arith.constant 0 : i32
    %c0_i32_0 = arith.constant 0 : i32
    return %arg0, %c0_i32 : i32, i32
  }
  func.func @transform_1(%arg0: i32) -> (i32, i32) {
    %c0_i32 = arith.constant 0 : i32
    %c0_i32_0 = arith.constant 0 : i32
    %c0_i32_1 = arith.constant 0 : i32
    return %c0_i32, %c0_i32_0 : i32, i32
  }
  func.func @transform_2(%arg0: i32) -> (i32, i32) {
    %c0_i32 = arith.constant 0 : i32
    %c0_i32_0 = arith.constant 0 : i32
    %c0_i32_1 = arith.constant 0 : i32
    return %c0_i32, %c0_i32_0 : i32, i32
  }
  func.func @transform_3(%arg0: i32) -> (i32, i32) {
    %c0_i32 = arith.constant 0 : i32
    %c0_i32_0 = arith.constant 0 : i32
    %c0_i32_1 = arith.constant 0 : i32
    return %c0_i32, %c0_i32_0 : i32, i32
  }
  func.func @transform_4(%arg0: i32) -> (i32, i32) {
    %c0_i32 = arith.constant 0 : i32
    %c0_i32_0 = arith.constant 0 : i32
    %c0_i32_1 = arith.constant 0 : i32
    return %c0_i32, %c0_i32_0 : i32, i32
  }
  func.func @transform_5(%arg0: i32) -> (i32, i32) {
    %c0_i32 = arith.constant 0 : i32
    %c0_i32_0 = arith.constant 0 : i32
    %c0_i32_1 = arith.constant 0 : i32
    return %c0_i32, %c0_i32_0 : i32, i32
  }
  func.func @transform_6(%arg0: i32) -> i32 {
    %c0_i32 = arith.constant 0 : i32
    %c0_i32_0 = arith.constant 0 : i32
    return %c0_i32 : i32
  }
  func.func @transform_7(%arg0: i32) -> (i32, i32) {
    %c0_i32 = arith.constant 0 : i32
    %c0_i32_0 = arith.constant 0 : i32
    return %arg0, %c0_i32 : i32, i32
  }
}

</mosaic_0001>

<llo_original>
// kernel: mul.33
$region0: #{mul.33}
  #allocation0 [shape = 's32[1]{0}', space=sflag, size = 0x4, scoped, tag = 'scoped memory for mul.33']
  %s0 = inlined_call_operand.vmem [shape: f32[8,8], index: 0, kind: input, shape index: {}]
  %s1 = inlined_call_operand.vmem [shape: f32[8,16,8,16], index: 1, kind: output, shape index: {}]
  // Predicated region
  $region2: #{mul.33} parent=0 // pred_check
    _
  $region3: #{mul.33} parent=0 // pred_check_branch
    %3 = sbr.rel (0) target = $region5
  $region4: #{mul.33} parent=0 // pred_region
    _
  $region5: #{mul.33} parent=0 // pred_fallthru
    _
  %v4 = vld [vmem:[%s0] ss:$0 sm:$0xff]
  %6 = vbcast.lane.b32.xlu0 %v4, 256
  %v7 = vpop.permute.xlu0 %6
  %8 = vst [vmem:[%s1] sm:$0xff] %v7
  %s9 = scalar_lea.vmem %s0, 1
  %v10 = vld [vmem:[%s9] ss:$0 sm:$0xff]
  %12 = vbcast.lane.b32.xlu0 %v10, 256
  %v13 = vpop.permute.xlu0 %12
  %s14 = scalar_lea.vmem %s1, 128
  %15 = vst [vmem:[%s14] sm:$0xff] %v13
  %s16 = scalar_lea.vmem %s0, 2
  %v17 = vld [vmem:[%s16] ss:$0 sm:$0xff]
  %19 = vbcast.lane.b32.xlu0 %v17, 256
  %v20 = vpop.permute.xlu0 %19
  %s21 = scalar_lea.vmem %s1, 256
  %22 = vst [vmem:[%s21] sm:$0xff] %v20
  %s23 = scalar_lea.vmem %s0, 3
  %v24 = vld [vmem:[%s23] ss:$0 sm:$0xff]
  %26 = vbcast.lane.b32.xlu0 %v24, 256
  %v27 = vpop.permute.xlu0 %26
  %s28 = scalar_lea.vmem %s1, 384
  %29 = vst [vmem:[%s28] sm:$0xff] %v27
  %s30 = scalar_lea.vmem %s0, 4
  %v31 = vld [vmem:[%s30] ss:$0 sm:$0xff]
  %33 = vbcast.lane.b32.xlu0 %v31, 256
  %v34 = vpop.permute.xlu0 %33
  %s35 = scalar_lea.vmem %s1, 512
  %36 = vst [vmem:[%s35] sm:$0xff] %v34
  %s37 = scalar_lea.vmem %s0, 5
  %v38 = vld [vmem:[%s37] ss:$0 sm:$0xff]
  %40 = vbcast.lane.b32.xlu0 %v38, 256
  %v41 = vpop.permute.xlu0 %40
  %s42 = scalar_lea.vmem %s1, 640
  %43 = vst [vmem:[%s42] sm:$0xff] %v41
  %s44 = scalar_lea.vmem %s0, 6
  %v45 = vld [vmem:[%s44] ss:$0 sm:$0xff]
  %47 = vbcast.lane.b32.xlu0 %v45, 256
  %v48 = vpop.permute.xlu0 %47
  %s49 = scalar_lea.vmem %s1, 768
  %50 = vst [vmem:[%s49] sm:$0xff] %v48
  %s51 = scalar_lea.vmem %s0, 7
  %v52 = vld [vmem:[%s51] ss:$0 sm:$0xff]
  %54 = vbcast.lane.b32.xlu0 %v52, 256
  %v55 = vpop.permute.xlu0 %54
  %s56 = scalar_lea.vmem %s1, 896
  %57 = vst [vmem:[%s56] sm:$0xff] %v55
  %s58 = scalar_lea.vmem %s1, 8
  %59 = vst [vmem:[%s58] sm:$0xff] %v7
  %s60 = scalar_lea.vmem %s1, 136
  %61 = vst [vmem:[%s60] sm:$0xff] %v13
  %s62 = scalar_lea.vmem %s1, 264
  %63 = vst [vmem:[%s62] sm:$0xff] %v20
  %s64 = scalar_lea.vmem %s1, 392
  %65 = vst [vmem:[%s64] sm:$0xff] %v27
  %s66 = scalar_lea.vmem %s1, 520
  %67 = vst [vmem:[%s66] sm:$0xff] %v34
  %s68 = scalar_lea.vmem %s1, 648
  %69 = vst [vmem:[%s68] sm:$0xff] %v41
  %s70 = scalar_lea.vmem %s1, 776
  %71 = vst [vmem:[%s70] sm:$0xff] %v48
  %s72 = scalar_lea.vmem %s1, 904
  %73 = vst [vmem:[%s72] sm:$0xff] %v55
  %s74 = scalar_lea.vmem %s1, 16
  %75 = vst [vmem:[%s74] sm:$0xff] %v7
  %s76 = scalar_lea.vmem %s1, 144
  %77 = vst [vmem:[%s76] sm:$0xff] %v13
  %s78 = scalar_lea.vmem %s1, 272
  %79 = vst [vmem:[%s78] sm:$0xff] %v20
  %s80 = scalar_lea.vmem %s1, 400
  %81 = vst [vmem:[%s80] sm:$0xff] %v27
  %s82 = scalar_lea.vmem %s1, 528
  %83 = vst [vmem:[%s82] sm:$0xff] %v34
  %s84 = scalar_lea.vmem %s1, 656
  %85 = vst [vmem:[%s84] sm:$0xff] %v41
  %s86 = scalar_lea.vmem %s1, 784
  %87 = vst [vmem:[%s86] sm:$0xff] %v48
  %s88 = scalar_lea.vmem %s1, 912
  %89 = vst [vmem:[%s88] sm:$0xff] %v55
  %s90 = scalar_lea.vmem %s1, 24
  %91 = vst [vmem:[%s90] sm:$0xff] %v7
  %s92 = scalar_lea.vmem %s1, 152
  %93 = vst [vmem:[%s92] sm:$0xff] %v13
  %s94 = scalar_lea.vmem %s1, 280
  %95 = vst [vmem:[%s94] sm:$0xff] %v20
  %s96 = scalar_lea.vmem %s1, 408
  %97 = vst [vmem:[%s96] sm:$0xff] %v27
  %s98 = scalar_lea.vmem %s1, 536
  %99 = vst [vmem:[%s98] sm:$0xff] %v34
  %s100 = scalar_lea.vmem %s1, 664
  %101 = vst [vmem:[%s100] sm:$0xff] %v41
  %s102 = scalar_lea.vmem %s1, 792
  %103 = vst [vmem:[%s102] sm:$0xff] %v48
  %s104 = scalar_lea.vmem %s1, 920
  %105 = vst [vmem:[%s104] sm:$0xff] %v55
  %s106 = scalar_lea.vmem %s1, 32
  %107 = vst [vmem:[%s106] sm:$0xff] %v7
  %s108 = scalar_lea.vmem %s1, 160
  %109 = vst [vmem:[%s108] sm:$0xff] %v13
  %s110 = scalar_lea.vmem %s1, 288
  %111 = vst [vmem:[%s110] sm:$0xff] %v20
  %s112 = scalar_lea.vmem %s1, 416
  %113 = vst [vmem:[%s112] sm:$0xff] %v27
  %s114 = scalar_lea.vmem %s1, 544
  %115 = vst [vmem:[%s114] sm:$0xff] %v34
  %s116 = scalar_lea.vmem %s1, 672
  %117 = vst [vmem:[%s116] sm:$0xff] %v41
  %s118 = scalar_lea.vmem %s1, 800
  %119 = vst [vmem:[%s118] sm:$0xff] %v48
  %s120 = scalar_lea.vmem %s1, 928
  %121 = vst [vmem:[%s120] sm:$0xff] %v55
  %s122 = scalar_lea.vmem %s1, 40
  %123 = vst [vmem:[%s122] sm:$0xff] %v7
  %s124 = scalar_lea.vmem %s1, 168
  %125 = vst [vmem:[%s124] sm:$0xff] %v13
  %s126 = scalar_lea.vmem %s1, 296
  %127 = vst [vmem:[%s126] sm:$0xff] %v20
  %s128 = scalar_lea.vmem %s1, 424
  %129 = vst [vmem:[%s128] sm:$0xff] %v27
  %s130 = scalar_lea.vmem %s1, 552
  %131 = vst [vmem:[%s130] sm:$0xff] %v34
  %s132 = scalar_lea.vmem %s1, 680
  %133 = vst [vmem:[%s132] sm:$0xff] %v41
  %s134 = scalar_lea.vmem %s1, 808
  %135 = vst [vmem:[%s134] sm:$0xff] %v48
  %s136 = scalar_lea.vmem %s1, 936
  %137 = vst [vmem:[%s136] sm:$0xff] %v55
  %s138 = scalar_lea.vmem %s1, 48
  %139 = vst [vmem:[%s138] sm:$0xff] %v7
  %s140 = scalar_lea.vmem %s1, 176
  %141 = vst [vmem:[%s140] sm:$0xff] %v13
  %s142 = scalar_lea.vmem %s1, 304
  %143 = vst [vmem:[%s142] sm:$0xff] %v20
  %s144 = scalar_lea.vmem %s1, 432
  %145 = vst [vmem:[%s144] sm:$0xff] %v27
  %s146 = scalar_lea.vmem %s1, 560
  %147 = vst [vmem:[%s146] sm:$0xff] %v34
  %s148 = scalar_lea.vmem %s1, 688
  %149 = vst [vmem:[%s148] sm:$0xff] %v41
  %s150 = scalar_lea.vmem %s1, 816
  %151 = vst [vmem:[%s150] sm:$0xff] %v48
  %s152 = scalar_lea.vmem %s1, 944
  %153 = vst [vmem:[%s152] sm:$0xff] %v55
  %s154 = scalar_lea.vmem %s1, 56
  %155 = vst [vmem:[%s154] sm:$0xff] %v7
  %s156 = scalar_lea.vmem %s1, 184
  %157 = vst [vmem:[%s156] sm:$0xff] %v13
  %s158 = scalar_lea.vmem %s1, 312
  %159 = vst [vmem:[%s158] sm:$0xff] %v20
  %s160 = scalar_lea.vmem %s1, 440
  %161 = vst [vmem:[%s160] sm:$0xff] %v27
  %s162 = scalar_lea.vmem %s1, 568
  %163 = vst [vmem:[%s162] sm:$0xff] %v34
  %s164 = scalar_lea.vmem %s1, 696
  %165 = vst [vmem:[%s164] sm:$0xff] %v41
  %s166 = scalar_lea.vmem %s1, 824
  %167 = vst [vmem:[%s166] sm:$0xff] %v48
  %s168 = scalar_lea.vmem %s1, 952
  %169 = vst [vmem:[%s168] sm:$0xff] %v55
  %s170 = scalar_lea.vmem %s1, 64
  %171 = vst [vmem:[%s170] sm:$0xff] %v7
  %s172 = scalar_lea.vmem %s1, 192
  %173 = vst [vmem:[%s172] sm:$0xff] %v13
  %s174 = scalar_lea.vmem %s1, 320
  %175 = vst [vmem:[%s174] sm:$0xff] %v20
  %s176 = scalar_lea.vmem %s1, 448
  %177 = vst [vmem:[%s176] sm:$0xff] %v27
  %s178 = scalar_lea.vmem %s1, 576
  %179 = vst [vmem:[%s178] sm:$0xff] %v34
  %s180 = scalar_lea.vmem %s1, 704
  %181 = vst [vmem:[%s180] sm:$0xff] %v41
  %s182 = scalar_lea.vmem %s1, 832
  %183 = vst [vmem:[%s182] sm:$0xff] %v48
  %s184 = scalar_lea.vmem %s1, 960
  %185 = vst [vmem:[%s184] sm:$0xff] %v55
  %s186 = scalar_lea.vmem %s1, 72
  %187 = vst [vmem:[%s186] sm:$0xff] %v7
  %s188 = scalar_lea.vmem %s1, 200
  %189 = vst [vmem:[%s188] sm:$0xff] %v13
  %s190 = scalar_lea.vmem %s1, 328
  %191 = vst [vmem:[%s190] sm:$0xff] %v20
  %s192 = scalar_lea.vmem %s1, 456
  %193 = vst [vmem:[%s192] sm:$0xff] %v27
  %s194 = scalar_lea.vmem %s1, 584
  %195 = vst [vmem:[%s194] sm:$0xff] %v34
  %s196 = scalar_lea.vmem %s1, 712
  %197 = vst [vmem:[%s196] sm:$0xff] %v41
  %s198 = scalar_lea.vmem %s1, 840
  %199 = vst [vmem:[%s198] sm:$0xff] %v48
  %s200 = scalar_lea.vmem %s1, 968
  %201 = vst [vmem:[%s200] sm:$0xff] %v55
  %s202 = scalar_lea.vmem %s1, 80
  %203 = vst [vmem:[%s202] sm:$0xff] %v7
  %s204 = scalar_lea.vmem %s1, 208
  %205 = vst [vmem:[%s204] sm:$0xff] %v13
  %s206 = scalar_lea.vmem %s1, 336
  %207 = vst [vmem:[%s206] sm:$0xff] %v20
  %s208 = scalar_lea.vmem %s1, 464
  %209 = vst [vmem:[%s208] sm:$0xff] %v27
  %s210 = scalar_lea.vmem %s1, 592
  %211 = vst [vmem:[%s210] sm:$0xff] %v34
  %s212 = scalar_lea.vmem %s1, 720
  %213 = vst [vmem:[%s212] sm:$0xff] %v41
  %s214 = scalar_lea.vmem %s1, 848
  %215 = vst [vmem:[%s214] sm:$0xff] %v48
  %s216 = scalar_lea.vmem %s1, 976
  %217 = vst [vmem:[%s216] sm:$0xff] %v55
  %s218 = scalar_lea.vmem %s1, 88
  %219 = vst [vmem:[%s218] sm:$0xff] %v7
  %s220 = scalar_lea.vmem %s1, 216
  %221 = vst [vmem:[%s220] sm:$0xff] %v13
  %s222 = scalar_lea.vmem %s1, 344
  %223 = vst [vmem:[%s222] sm:$0xff] %v20
  %s224 = scalar_lea.vmem %s1, 472
  %225 = vst [vmem:[%s224] sm:$0xff] %v27
  %s226 = scalar_lea.vmem %s1, 600
  %227 = vst [vmem:[%s226] sm:$0xff] %v34
  %s228 = scalar_lea.vmem %s1, 728
  %229 = vst [vmem:[%s228] sm:$0xff] %v41
  %s230 = scalar_lea.vmem %s1, 856
  %231 = vst [vmem:[%s230] sm:$0xff] %v48
  %s232 = scalar_lea.vmem %s1, 984
  %233 = vst [vmem:[%s232] sm:$0xff] %v55
  %s234 = scalar_lea.vmem %s1, 96
  %235 = vst [vmem:[%s234] sm:$0xff] %v7
  %s236 = scalar_lea.vmem %s1, 224
  %237 = vst [vmem:[%s236] sm:$0xff] %v13
  %s238 = scalar_lea.vmem %s1, 352
  %239 = vst [vmem:[%s238] sm:$0xff] %v20
  %s240 = scalar_lea.vmem %s1, 480
  %241 = vst [vmem:[%s240] sm:$0xff] %v27
  %s242 = scalar_lea.vmem %s1, 608
  %243 = vst [vmem:[%s242] sm:$0xff] %v34
  %s244 = scalar_lea.vmem %s1, 736
  %245 = vst [vmem:[%s244] sm:$0xff] %v41
  %s246 = scalar_lea.vmem %s1, 864
  %247 = vst [vmem:[%s246] sm:$0xff] %v48
  %s248 = scalar_lea.vmem %s1, 992
  %249 = vst [vmem:[%s248] sm:$0xff] %v55
  %s250 = scalar_lea.vmem %s1, 104
  %251 = vst [vmem:[%s250] sm:$0xff] %v7
  %s252 = scalar_lea.vmem %s1, 232
  %253 = vst [vmem:[%s252] sm:$0xff] %v13
  %s254 = scalar_lea.vmem %s1, 360
  %255 = vst [vmem:[%s254] sm:$0xff] %v20
  %s256 = scalar_lea.vmem %s1, 488
  %257 = vst [vmem:[%s256] sm:$0xff] %v27
  %s258 = scalar_lea.vmem %s1, 616
  %259 = vst [vmem:[%s258] sm:$0xff] %v34
  %s260 = scalar_lea.vmem %s1, 744
  %261 = vst [vmem:[%s260] sm:$0xff] %v41
  %s262 = scalar_lea.vmem %s1, 872
  %263 = vst [vmem:[%s262] sm:$0xff] %v48
  %s264 = scalar_lea.vmem %s1, 1000
  %265 = vst [vmem:[%s264] sm:$0xff] %v55
  %s266 = scalar_lea.vmem %s1, 112
  %267 = vst [vmem:[%s266] sm:$0xff] %v7
  %s268 = scalar_lea.vmem %s1, 240
  %269 = vst [vmem:[%s268] sm:$0xff] %v13
  %s270 = scalar_lea.vmem %s1, 368
  %271 = vst [vmem:[%s270] sm:$0xff] %v20
  %s272 = scalar_lea.vmem %s1, 496
  %273 = vst [vmem:[%s272] sm:$0xff] %v27
  %s274 = scalar_lea.vmem %s1, 624
  %275 = vst [vmem:[%s274] sm:$0xff] %v34
  %s276 = scalar_lea.vmem %s1, 752
  %277 = vst [vmem:[%s276] sm:$0xff] %v41
  %s278 = scalar_lea.vmem %s1, 880
  %279 = vst [vmem:[%s278] sm:$0xff] %v48
  %s280 = scalar_lea.vmem %s1, 1008
  %281 = vst [vmem:[%s280] sm:$0xff] %v55
  %s282 = scalar_lea.vmem %s1, 120
  %283 = vst [vmem:[%s282] sm:$0xff] %v7
  %s284 = scalar_lea.vmem %s1, 248
  %285 = vst [vmem:[%s284] sm:$0xff] %v13
  %s286 = scalar_lea.vmem %s1, 376
  %287 = vst [vmem:[%s286] sm:$0xff] %v20
  %s288 = scalar_lea.vmem %s1, 504
  %289 = vst [vmem:[%s288] sm:$0xff] %v27
  %s290 = scalar_lea.vmem %s1, 632
  %291 = vst [vmem:[%s290] sm:$0xff] %v34
  %s292 = scalar_lea.vmem %s1, 760
  %293 = vst [vmem:[%s292] sm:$0xff] %v41
  %s294 = scalar_lea.vmem %s1, 888
  %295 = vst [vmem:[%s294] sm:$0xff] %v48
  %s296 = scalar_lea.vmem %s1, 1016
  %297 = vst [vmem:[%s296] sm:$0xff] %v55

// kernel: replicator_shallow_mlp.1
$region0: #{replicator_shallow_mlp.1}
  #allocation0 [shape = 'u32[]', space=smem, size = 0x4, offset = 0x4, fixed_abs, tag = 'smem constant byte address 0x4 - core index']
  #allocation1 [shape = 'u32[144,128]{1,0:T(1,128)}', space=vmem, size = 0x12000, scoped, tag = 'internal scratch']
  #allocation2 [shape = 'f32[1]{0:T(128)S(6)}', space=smem, size = 0x200, scoped, tag = 'scoped memory for replicator_shallow_mlp.1']
  %s0 = inlined_call_operand.vmem [shape: f32[64,128], index: 0, kind: input, shape index: {}]
  %s1 = inlined_call_operand.vmem [shape: f32[128,256], index: 1, kind: input, shape index: {}]
  %s2 = inlined_call_operand.vmem [shape: f32[1,256], index: 2, kind: input, shape index: {}]
  %s3 = inlined_call_operand.vmem [shape: f32[256,128], index: 3, kind: input, shape index: {}]
  %s4 = inlined_call_operand.vmem [shape: f32[1,128], index: 4, kind: input, shape index: {}]
  %s5 = inlined_call_operand.vmem [shape: f32[128,128], index: 5, kind: input, shape index: {}]
  %s6 = inlined_call_operand.<no memory space> [shape: f32[1], index: 6, kind: input, shape index: {}]
  %s7 = inlined_call_operand.vmem [shape: f32[64,128], index: 7, kind: output, shape index: {}]
  %s8 = sld [smem:[#allocation0]]
  $region61: #{replicator_shallow_mlp.1} parent=0
    _
  %s10 = ssub.s32 1, %s8
  %s11 = scalar_select 0, %s10, %s8
  %12 = sst [smem:[#allocation2]] %s6
  loop: start=0, step=1, limit=6
  $region2: #{replicator_shallow_mlp.1} parent=0 // loop_pre_header
    _
  $region3: #{replicator_shallow_mlp.1} parent=0 // loop_header
    %s14 = sphi 0, %s18
    %p15 = scmp.ge.s32.totalorder %s14, 6
    %s24 = sphi 0, %s26
    %s27 = sphi 0, %s24
    %s28 = sphi 0, %s27
    %s44 = sphi 0, %s28
    %s48 = sphi 0, %s48
    %s50 = sphi 0, %s48
    %s51 = sphi 0, %s50
    %s65 = sphi 0, %s51
    %s69 = sphi 0, %s69
    %s71 = sphi 0, %s69
    %s72 = sphi 0, %s71
    %s86 = sphi 0, %s72
    %s90 = sphi 0, %s90
    %s92 = sphi 0, %s90
    %s93 = sphi 0, %s92
    %s107 = sphi 0, %s93
    %s111 = sphi 0, %s111
    %s113 = sphi 0, %s111
    %s114 = sphi 0, %s113
    %s128 = sphi 0, %s114
    %s132 = sphi 0, %s132
    %s134 = sphi 0, %s132
    %s135 = sphi 0, %s134
    %s149 = sphi 0, %s135
    %s153 = sphi 0, %s153
    %s155 = sphi 0, %s153
    %s156 = sphi 0, %s155
    %s170 = sphi 0, %s156
    %s176 = sphi 0, %s178
    %s179 = sphi 0, %s176
    %s180 = sphi 0, %s179
    %s196 = sphi 0, %s180
  $region4: #{replicator_shallow_mlp.1} parent=0 // loop_header_branch
    %17 = sbr.rel (%p15) target = $region8
  $region5: #{replicator_shallow_mlp.1} parent=0 // loop_body
    %s19 = ssub.s32 %s14, 1
    %s20 = ssub.s32 %s14, 2
    %s21 = sadd.s32 %s14, 1
    %s22 = ssub.s32 %s14, %s21
    %p23 = scmp.eq.s32.totalorder %s22, 0
    %s25 = sadd.s32 %s24, 1
    %s26 = scalar_select %p23, %s24, %s25
    %p29 = pneg %p23
    %p30 = scmp.eq.s32.totalorder %s14, 3
    %p31 = por %p29, %p30
    %p32 = scmp.ne.s32.totalorder %s24, %s27
    %p33 = scmp.eq.s32.totalorder %s14, 0
    %p34 = por %p32, %p33
    %p35 = scmp.ne.s32.totalorder %s24, %s27
    %p36 = scmp.eq.s32.totalorder %s19, 3
    %p37 = por %p35, %p36
    %p38 = scmp.ne.s32.totalorder %s27, %s28
    %p39 = scmp.eq.s32.totalorder %s19, 0
    %p40 = por %p38, %p39
    %p41 = scmp.ne.s32.totalorder %s27, %s28
    %p42 = scmp.eq.s32.totalorder %s20, 3
    %p43 = por %p41, %p42
    %p45 = scmp.ne.s32.totalorder %s28, %s44
    %p46 = scmp.eq.s32.totalorder %s20, 0
    %p47 = por %p45, %p46
    %s49 = sadd.s32 %s48, 1
    %p52 = scmp.eq.s32.totalorder %s14, 3
    %p53 = scmp.ne.s32.totalorder %s48, %s50
    %p54 = scmp.eq.s32.totalorder %s14, 0
    %p55 = por %p53, %p54
    %p56 = scmp.ne.s32.totalorder %s48, %s50
    %p57 = scmp.eq.s32.totalorder %s19, 3
    %p58 = por %p56, %p57
    %p59 = scmp.ne.s32.totalorder %s50, %s51
    %p60 = scmp.eq.s32.totalorder %s19, 0
    %p61 = por %p59, %p60
    %p62 = scmp.ne.s32.totalorder %s50, %s51
    %p63 = scmp.eq.s32.totalorder %s20, 3
    %p64 = por %p62, %p63
    %p66 = scmp.ne.s32.totalorder %s51, %s65
    %p67 = scmp.eq.s32.totalorder %s20, 0
    %p68 = por %p66, %p67
    %s70 = sadd.s32 %s69, 1
    %p73 = scmp.eq.s32.totalorder %s14, 3
    %p74 = scmp.ne.s32.totalorder %s69, %s71
    %p75 = scmp.eq.s32.totalorder %s14, 0
    %p76 = por %p74, %p75
    %p77 = scmp.ne.s32.totalorder %s69, %s71
    %p78 = scmp.eq.s32.totalorder %s19, 3
    %p79 = por %p77, %p78
    %p80 = scmp.ne.s32.totalorder %s71, %s72
    %p81 = scmp.eq.s32.totalorder %s19, 0
    %p82 = por %p80, %p81
    %p83 = scmp.ne.s32.totalorder %s71, %s72
    %p84 = scmp.eq.s32.totalorder %s20, 3
    %p85 = por %p83, %p84
    %p87 = scmp.ne.s32.totalorder %s72, %s86
    %p88 = scmp.eq.s32.totalorder %s20, 0
    %p89 = por %p87, %p88
    %s91 = sadd.s32 %s90, 1
    %p94 = scmp.eq.s32.totalorder %s14, 3
    %p95 = scmp.ne.s32.totalorder %s90, %s92
    %p96 = scmp.eq.s32.totalorder %s14, 0
    %p97 = por %p95, %p96
    %p98 = scmp.ne.s32.totalorder %s90, %s92
    %p99 = scmp.eq.s32.totalorder %s19, 3
    %p100 = por %p98, %p99
    %p101 = scmp.ne.s32.totalorder %s92, %s93
    %p102 = scmp.eq.s32.totalorder %s19, 0
    %p103 = por %p101, %p102
    %p104 = scmp.ne.s32.totalorder %s92, %s93
    %p105 = scmp.eq.s32.totalorder %s20, 3
    %p106 = por %p104, %p105
    %p108 = scmp.ne.s32.totalorder %s93, %s107
    %p109 = scmp.eq.s32.totalorder %s20, 0
    %p110 = por %p108, %p109
    %s112 = sadd.s32 %s111, 1
    %p115 = scmp.eq.s32.totalorder %s14, 3
    %p116 = scmp.ne.s32.totalorder %s111, %s113
    %p117 = scmp.eq.s32.totalorder %s14, 0
    %p118 = por %p116, %p117
    %p119 = scmp.ne.s32.totalorder %s111, %s113
    %p120 = scmp.eq.s32.totalorder %s19, 3
    %p121 = por %p119, %p120
    %p122 = scmp.ne.s32.totalorder %s113, %s114
    %p123 = scmp.eq.s32.totalorder %s19, 0
    %p124 = por %p122, %p123
    %p125 = scmp.ne.s32.totalorder %s113, %s114
    %p126 = scmp.eq.s32.totalorder %s20, 3
    %p127 = por %p125, %p126
    %p129 = scmp.ne.s32.totalorder %s114, %s128
    %p130 = scmp.eq.s32.totalorder %s20, 0
    %p131 = por %p129, %p130
    %s133 = sadd.s32 %s132, 1
    %p136 = scmp.eq.s32.totalorder %s14, 3
    %p137 = scmp.ne.s32.totalorder %s132, %s134
    %p138 = scmp.eq.s32.totalorder %s14, 0
    %p139 = por %p137, %p138
    %p140 = scmp.ne.s32.totalorder %s132, %s134
    %p141 = scmp.eq.s32.totalorder %s19, 3
    %p142 = por %p140, %p141
    %p143 = scmp.ne.s32.totalorder %s134, %s135
    %p144 = scmp.eq.s32.totalorder %s19, 0
    %p145 = por %p143, %p144
    %p146 = scmp.ne.s32.totalorder %s134, %s135
    %p147 = scmp.eq.s32.totalorder %s20, 3
    %p148 = por %p146, %p147
    %p150 = scmp.ne.s32.totalorder %s135, %s149
    %p151 = scmp.eq.s32.totalorder %s20, 0
    %p152 = por %p150, %p151
    %s154 = sadd.s32 %s153, 1
    %p157 = scmp.eq.s32.totalorder %s14, 3
    %p158 = scmp.ne.s32.totalorder %s153, %s155
    %p159 = scmp.eq.s32.totalorder %s14, 0
    %p160 = por %p158, %p159
    %p161 = scmp.ne.s32.totalorder %s153, %s155
    %p162 = scmp.eq.s32.totalorder %s19, 3
    %p163 = por %p161, %p162
    %p164 = scmp.ne.s32.totalorder %s155, %s156
    %p165 = scmp.eq.s32.totalorder %s19, 0
    %p166 = por %p164, %p165
    %p167 = scmp.ne.s32.totalorder %s155, %s156
    %p168 = scmp.eq.s32.totalorder %s20, 3
    %p169 = por %p167, %p168
    %p171 = scmp.ne.s32.totalorder %s156, %s170
    %p172 = scmp.eq.s32.totalorder %s20, 0
    %p173 = por %p171, %p172
    %s174 = ssub.s32 %s14, %s21
    %p175 = scmp.eq.s32.totalorder %s174, 0
    %s177 = sadd.s32 %s176, 1
    %s178 = scalar_select %p175, %s176, %s177
    %p181 = pneg %p175
    %p182 = scmp.eq.s32.totalorder %s14, 3
    %p183 = por %p181, %p182
    %p184 = scmp.ne.s32.totalorder %s176, %s179
    %p185 = scmp.eq.s32.totalorder %s14, 0
    %p186 = por %p184, %p185
    %p187 = scmp.ne.s32.totalorder %s176, %s179
    %p188 = scmp.eq.s32.totalorder %s19, 3
    %p189 = por %p187, %p188
    %p190 = scmp.ne.s32.totalorder %s179, %s180
    %p191 = scmp.eq.s32.totalorder %s19, 0
    %p192 = por %p190, %p191
    %p193 = scmp.ne.s32.totalorder %s179, %s180
    %p194 = scmp.eq.s32.totalorder %s20, 3
    %p195 = por %p193, %p194
    %p197 = scmp.ne.s32.totalorder %s180, %s196
    %p198 = scmp.eq.s32.totalorder %s20, 0
    %p199 = por %p197, %p198
    %p200 = scmp.le.s32.totalorder 1, %s14
    %p201 = scmp.lt.s32.totalorder %s14, 5
    %p202 = pnand %p200, %p201
    %p203 = pneg %p202
    // Predicated region
    $region9: #{replicator_shallow_mlp.1} parent=5 // pred_check
      _
    $region10: #{replicator_shallow_mlp.1} parent=5 // pred_check_branch
      %205 = sbr.rel (%p202) target = $region12
    $region11: #{replicator_shallow_mlp.1} parent=5 // pred_region
      %s206 = ssub.s32 %s14, 1
      // Predicated region
      $region13: #{replicator_shallow_mlp.1} parent=11 // pred_check
        %p207 = pneg %p61
      $region14: #{replicator_shallow_mlp.1} parent=11 // pred_check_branch
        %209 = sbr.rel (%p207) target = $region16
      $region15: #{replicator_shallow_mlp.1} parent=11 // pred_region
        _
      $region16: #{replicator_shallow_mlp.1} parent=11 // pred_fallthru
        _
      // Predicated region
      $region17: #{replicator_shallow_mlp.1} parent=11 // pred_check
        %p210 = pneg %p82
      $region18: #{replicator_shallow_mlp.1} parent=11 // pred_check_branch
        %212 = sbr.rel (%p210) target = $region20
      $region19: #{replicator_shallow_mlp.1} parent=11 // pred_region
        _
      $region20: #{replicator_shallow_mlp.1} parent=11 // pred_fallthru
        _
      // Predicated region
      $region21: #{replicator_shallow_mlp.1} parent=11 // pred_check
        %p213 = pneg %p103
      $region22: #{replicator_shallow_mlp.1} parent=11 // pred_check_branch
        %215 = sbr.rel (%p213) target = $region24
      $region23: #{replicator_shallow_mlp.1} parent=11 // pred_region
        _
      $region24: #{replicator_shallow_mlp.1} parent=11 // pred_fallthru
        _
      // Predicated region
      $region25: #{replicator_shallow_mlp.1} parent=11 // pred_check
        %p216 = pneg %p124
      $region26: #{replicator_shallow_mlp.1} parent=11 // pred_check_branch
        %218 = sbr.rel (%p216) target = $region28
      $region27: #{replicator_shallow_mlp.1} parent=11 // pred_region
        _
      $region28: #{replicator_shallow_mlp.1} parent=11 // pred_fallthru
        _
      // Predicated region
      $region29: #{replicator_shallow_mlp.1} parent=11 // pred_check
        %p219 = pneg %p145
      $region30: #{replicator_shallow_mlp.1} parent=11 // pred_check_branch
        %221 = sbr.rel (%p219) target = $region32
      $region31: #{replicator_shallow_mlp.1} parent=11 // pred_region
        _
      $region32: #{replicator_shallow_mlp.1} parent=11 // pred_fallthru
        _
      // Predicated region
      $region33: #{replicator_shallow_mlp.1} parent=11 // pred_check
        %p222 = pneg %p166
      $region34: #{replicator_shallow_mlp.1} parent=11 // pred_check_branch
        %224 = sbr.rel (%p222) target = $region36
      $region35: #{replicator_shallow_mlp.1} parent=11 // pred_region
        _
      $region36: #{replicator_shallow_mlp.1} parent=11 // pred_fallthru
        _
    $region12: #{replicator_shallow_mlp.1} parent=5 // pred_fallthru
      _
    %p225 = scmp.lt.s32.totalorder %s14, 4
    // Predicated region
    $region37: #{replicator_shallow_mlp.1} parent=5 // pred_check
      %p226 = pneg %p225
    $region38: #{replicator_shallow_mlp.1} parent=5 // pred_check_branch
      %228 = sbr.rel (%p226) target = $region40
    $region39: #{replicator_shallow_mlp.1} parent=5 // pred_region
      // Predicated region
      $region41: #{replicator_shallow_mlp.1} parent=39 // pred_check
        %p229 = pneg %p34
      $region42: #{replicator_shallow_mlp.1} parent=39 // pred_check_branch
        %231 = sbr.rel (%p229) target = $region44
      $region43: #{replicator_shallow_mlp.1} parent=39 // pred_region
        %s232 = smul.u32 2, %s14
        %p233 = scmp.lt.s32.totalorder %s232, 7
        %s234 = scalar_select %p233, %s232, 7
        %s235 = smul.addr %s234, 8
        %s236 = scalar_lea.vmem %s0, %s235
        %s237 = smul.u32 2, %s14
      $region44: #{replicator_shallow_mlp.1} parent=39 // pred_fallthru
        _
    $region40: #{replicator_shallow_mlp.1} parent=5 // pred_fallthru
      _
    %p238 = scmp.le.s32.totalorder 1, %s14
    %p239 = scmp.lt.s32.totalorder %s14, 5
    %p240 = pnand %p238, %p239
    %p241 = pneg %p240
    // Predicated region
    $region45: #{replicator_shallow_mlp.1} parent=5 // pred_check
      _
    $region46: #{replicator_shallow_mlp.1} parent=5 // pred_check_branch
      %243 = sbr.rel (%p240) target = $region48
    $region47: #{replicator_shallow_mlp.1} parent=5 // pred_region
      %s244 = ssub.s32 %s14, 1
      %s245 = smul.u32 2, %s19
      %p246 = scmp.lt.s32.totalorder %s245, 7
      %s247 = scalar_select %p246, %s245, 7
      %s248 = smul.addr %s247, 8
      %s249 = scalar_lea.vmem %s0, %s248
      %p250 = pneg %p40
      %p251 = pneg %p37
      %p252 = pneg %p61
      %p253 = pneg %p58
      %p254 = pneg %p82
      %p255 = pneg %p79
      %p256 = pneg %p103
      %p257 = pneg %p100
      %p258 = pneg %p124
      %p259 = pneg %p121
      %p260 = pneg %p145
      %p261 = pneg %p142
      %p262 = pneg %p166
      %p263 = pneg %p163
      %p264 = pneg %p192
      %p265 = pneg %p189
      %s266 = smul.u32 2, %s19
      %p267 = scmp.lt.s32.totalorder %s266, 7
      %s268 = scalar_select %p267, %s266, 7
      %s269 = smul.addr %s268, 8
      %s270 = scalar_lea.vmem %s7, %s269
      %s271 = smul.u32 2, %s19
      %p272 = scmp.lt.s32.totalorder %s271, 7
      %s273 = scalar_select %p272, %s271, 7
      %s274 = smul.addr %s273, 8
      %s275 = scalar_lea.vmem %s0, %s274
      %s276 = smul.u32 2, %s19
      %s277 = smul.u32 2, %s19
      %p278 = scmp.lt.s32.totalorder %s277, 7
      %s279 = scalar_select %p278, %s277, 7
      %s280 = smul.addr %s279, 8
      %s281 = scalar_lea.vmem %s7, %s280
      %s282 = smul.u32 2, %s19
      %s283 = sld [smem:[#allocation2]]
      %v284 = vld [vmem:[%s275] sm:$0xff]
      %v285 = vld [vmem:[%s275 + $0x8] sm:$0xff]
      %v286 = vld [vmem:[%s1] sm:$0xff]
      %v287 = vld [vmem:[%s1 + $0x8] sm:$0xff]
      %v288 = vld [vmem:[%s1 + $0x10] sm:$0xff]
      %v289 = vld [vmem:[%s1 + $0x18] sm:$0xff]
      %v290 = vld [vmem:[%s1 + $0x20] sm:$0xff]
      %v291 = vld [vmem:[%s1 + $0x28] sm:$0xff]
      %v292 = vld [vmem:[%s1 + $0x30] sm:$0xff]
      %v293 = vld [vmem:[%s1 + $0x38] sm:$0xff]
      %v294 = vld [vmem:[%s1 + $0x40] sm:$0xff]
      %v295 = vld [vmem:[%s1 + $0x48] sm:$0xff]
      %v296 = vld [vmem:[%s1 + $0x50] sm:$0xff]
      %v297 = vld [vmem:[%s1 + $0x58] sm:$0xff]
      %v298 = vld [vmem:[%s1 + $0x60] sm:$0xff]
      %v299 = vld [vmem:[%s1 + $0x68] sm:$0xff]
      %v300 = vld [vmem:[%s1 + $0x70] sm:$0xff]
      %v301 = vld [vmem:[%s1 + $0x78] sm:$0xff]
      %v302 = vld [vmem:[%s1 + $0x80] sm:$0xff]
      %v303 = vld [vmem:[%s1 + $0x88] sm:$0xff]
      %v304 = vld [vmem:[%s1 + $0x90] sm:$0xff]
      %v305 = vld [vmem:[%s1 + $0x98] sm:$0xff]
      %v306 = vld [vmem:[%s1 + $0xa0] sm:$0xff]
      %v307 = vld [vmem:[%s1 + $0xa8] sm:$0xff]
      %v308 = vld [vmem:[%s1 + $0xb0] sm:$0xff]
      %v309 = vld [vmem:[%s1 + $0xb8] sm:$0xff]
      %v310 = vld [vmem:[%s1 + $0xc0] sm:$0xff]
      %v311 = vld [vmem:[%s1 + $0xc8] sm:$0xff]
      %v312 = vld [vmem:[%s1 + $0xd0] sm:$0xff]
      %v313 = vld [vmem:[%s1 + $0xd8] sm:$0xff]
      %v314 = vld [vmem:[%s1 + $0xe0] sm:$0xff]
      %v315 = vld [vmem:[%s1 + $0xe8] sm:$0xff]
      %v316 = vld [vmem:[%s1 + $0xf0] sm:$0xff]
      %v317 = vld [vmem:[%s1 + $0xf8] sm:$0xff]
      %v318 = vld [vmem:[%s2] sm:$0x3]
      %v320 = vlaneseq
      %v321 = vshrl.u32 %v320, 7
      %v322 = vsub.s32 0, %v321
      %v323 = vrot.slane %v318, %v322
      %v324 = vlaneseq
      %v325 = vshrl.u32 %v324, 7
      %v326 = vsub.s32 1, %v325
      %v327 = vrot.slane %v318, %v326
      %330 = vmatprep.subr.mxu0 %v287
      %331 = vmatpush1.msra.mxu0 %v286
      %332 = vmatprep.subr.mxu0 %v289
      %333 = vmatpush1.msra.mxu0 %v288
      %334 = vmatprep.subr.mxu0 %v291
      %335 = vmatpush1.msra.mxu0 %v290
      %336 = vmatprep.subr.mxu0 %v293
      %337 = vmatpush1.msra.mxu0 %v292
      %338 = vmatprep.subr.mxu0 %v295
      %339 = vmatpush1.msra.mxu0 %v294
      %340 = vmatprep.subr.mxu0 %v297
      %341 = vmatpush1.msra.mxu0 %v296
      %342 = vmatprep.subr.mxu0 %v299
      %343 = vmatpush1.msra.mxu0 %v298
      %344 = vmatprep.subr.mxu0 %v301
      %345 = vmatpush1.msra.mxu0 %v300
      %346 = vmatprep.subr.mxu0 %v303
      %347 = vmatpush1.msra.mxu0 %v302
      %348 = vmatprep.subr.mxu0 %v305
      %349 = vmatpush1.msra.mxu0 %v304
      %350 = vmatprep.subr.mxu0 %v307
      %351 = vmatpush1.msra.mxu0 %v306
      %352 = vmatprep.subr.mxu0 %v309
      %353 = vmatpush1.msra.mxu0 %v308
      %354 = vmatprep.subr.mxu0 %v311
      %355 = vmatpush1.msra.mxu0 %v310
      %356 = vmatprep.subr.mxu0 %v313
      %357 = vmatpush1.msra.mxu0 %v312
      %358 = vmatprep.subr.mxu0 %v315
      %359 = vmatpush1.msra.mxu0 %v314
      %360 = vmatprep.subr.mxu0 %v317
      %361 = vmatpush1.msra.mxu0 %v316
      %362 = vmatprep.subr.mxu0 0.0
      %363 = vmatpush1.msra.mxu0 0.0
      %364 = vmatprep.subr.mxu0 0.0
      %365 = vmatpush1.msra.mxu0 0.0
      %366 = vmatprep.subr.mxu0 0.0
      %367 = vmatpush1.msra.mxu0 0.0
      %368 = vmatprep.subr.mxu0 0.0
      %369 = vmatpush1.msra.mxu0 0.0
      %370 = vmatprep.subr.mxu0 0.0
      %371 = vmatpush1.msra.mxu0 0.0
      %372 = vmatprep.subr.mxu0 0.0
      %373 = vmatpush1.msra.mxu0 0.0
      %374 = vmatprep.subr.mxu0 0.0
      %375 = vmatpush1.msra.mxu0 0.0
      %376 = vmatprep.subr.mxu0 0.0
      %377 = vmatpush1.msra.mxu0 0.0
      %378 = vmatprep.subr.mxu0 0.0
      %379 = vmatpush1.msra.mxu0 0.0
      %380 = vmatprep.subr.mxu0 0.0
      %381 = vmatpush1.msra.mxu0 0.0
      %382 = vmatprep.subr.mxu0 0.0
      %383 = vmatpush1.msra.mxu0 0.0
      %384 = vmatprep.subr.mxu0 0.0
      %385 = vmatpush1.msra.mxu0 0.0
      %386 = vmatprep.subr.mxu0 0.0
      %387 = vmatpush1.msra.mxu0 0.0
      %388 = vmatprep.subr.mxu0 0.0
      %389 = vmatpush1.msra.mxu0 0.0
      %390 = vmatprep.subr.mxu0 0.0
      %391 = vmatpush1.msra.mxu0 0.0
      %392 = vmatprep.subr.mxu0 0.0
      %393 = vmatpush1.msra.mxu0 0.0
      %394 = vmatprep.mubr.f32.mxu0 0.0
      %395 = vmatmul.mubr.f32.gmra.mrb[0].mxu0 %v284
      %v396 = vpop.f32.mrb[0].mxu0
      %v397 = vadd.f32 %v323, %v396
      %v398 = vpop.f32.mrb[0].mxu0
      %v399 = vadd.f32 %v327, %v398
      %400 = vmatprep.mubr.f32.mxu0 0.0
      %401 = vmatmul.mubr.f32.gmra.mrb[0].mxu0 %v285
      %v402 = vpop.f32.mrb[0].mxu0
      %v403 = vadd.f32 %v323, %v402
      %v404 = vpop.f32.mrb[0].mxu0
      %v405 = vadd.f32 %v327, %v404
      %406 = vdwg.mxu0
      %v407 = vtanh.pop %v397
      %v408 = vtanh.pop %v399
      %v409 = vtanh.pop %v403
      %v410 = vtanh.pop %v405
      %v411 = vld [vmem:[%s3] sm:$0xff]
      %v412 = vld [vmem:[%s3 + $0x8] sm:$0xff]
      %v413 = vld [vmem:[%s3 + $0x10] sm:$0xff]
      %v414 = vld [vmem:[%s3 + $0x18] sm:$0xff]
      %v415 = vld [vmem:[%s3 + $0x20] sm:$0xff]
      %v416 = vld [vmem:[%s3 + $0x28] sm:$0xff]
      %v417 = vld [vmem:[%s3 + $0x30] sm:$0xff]
      %v418 = vld [vmem:[%s3 + $0x38] sm:$0xff]
      %v419 = vld [vmem:[%s3 + $0x40] sm:$0xff]
      %v420 = vld [vmem:[%s3 + $0x48] sm:$0xff]
      %v421 = vld [vmem:[%s3 + $0x50] sm:$0xff]
      %v422 = vld [vmem:[%s3 + $0x58] sm:$0xff]
      %v423 = vld [vmem:[%s3 + $0x60] sm:$0xff]
      %v424 = vld [vmem:[%s3 + $0x68] sm:$0xff]
      %v425 = vld [vmem:[%s3 + $0x70] sm:$0xff]
      %v426 = vld [vmem:[%s3 + $0x78] sm:$0xff]
      %v427 = vld [vmem:[%s3 + $0x80] sm:$0xff]
      %v428 = vld [vmem:[%s3 + $0x88] sm:$0xff]
      %v429 = vld [vmem:[%s3 + $0x90] sm:$0xff]
      %v430 = vld [vmem:[%s3 + $0x98] sm:$0xff]
      %v431 = vld [vmem:[%s3 + $0xa0] sm:$0xff]
      %v432 = vld [vmem:[%s3 + $0xa8] sm:$0xff]
      %v433 = vld [vmem:[%s3 + $0xb0] sm:$0xff]
      %v434 = vld [vmem:[%s3 + $0xb8] sm:$0xff]
      %v435 = vld [vmem:[%s3 + $0xc0] sm:$0xff]
      %v436 = vld [vmem:[%s3 + $0xc8] sm:$0xff]
      %v437 = vld [vmem:[%s3 + $0xd0] sm:$0xff]
      %v438 = vld [vmem:[%s3 + $0xd8] sm:$0xff]
      %v439 = vld [vmem:[%s3 + $0xe0] sm:$0xff]
      %v440 = vld [vmem:[%s3 + $0xe8] sm:$0xff]
      %v441 = vld [vmem:[%s3 + $0xf0] sm:$0xff]
      %v442 = vld [vmem:[%s3 + $0xf8] sm:$0xff]
      %v443 = vld [vmem:[%s4] sm:$0x1]
      %v445 = vlaneseq
      %v446 = vshrl.u32 %v445, 7
      %v447 = vsub.s32 0, %v446
      %v448 = vrot.slane %v443, %v447
      %450 = vmatprep.subr.mxu0 0.0
      %451 = vmatpush1.msra.mxu0 %v411
      %452 = vmatprep.subr.mxu0 0.0
      %453 = vmatpush1.msra.mxu0 %v412
      %454 = vmatprep.subr.mxu0 0.0
      %455 = vmatpush1.msra.mxu0 %v413
      %456 = vmatprep.subr.mxu0 0.0
      %457 = vmatpush1.msra.mxu0 %v414
      %458 = vmatprep.subr.mxu0 0.0
      %459 = vmatpush1.msra.mxu0 %v415
      %460 = vmatprep.subr.mxu0 0.0
      %461 = vmatpush1.msra.mxu0 %v416
      %462 = vmatprep.subr.mxu0 0.0
      %463 = vmatpush1.msra.mxu0 %v417
      %464 = vmatprep.subr.mxu0 0.0
      %465 = vmatpush1.msra.mxu0 %v418
      %466 = vmatprep.subr.mxu0 0.0
      %467 = vmatpush1.msra.mxu0 %v419
      %468 = vmatprep.subr.mxu0 0.0
      %469 = vmatpush1.msra.mxu0 %v420
      %470 = vmatprep.subr.mxu0 0.0
      %471 = vmatpush1.msra.mxu0 %v421
      %472 = vmatprep.subr.mxu0 0.0
      %473 = vmatpush1.msra.mxu0 %v422
      %474 = vmatprep.subr.mxu0 0.0
      %475 = vmatpush1.msra.mxu0 %v423
      %476 = vmatprep.subr.mxu0 0.0
      %477 = vmatpush1.msra.mxu0 %v424
      %478 = vmatprep.subr.mxu0 0.0
      %479 = vmatpush1.msra.mxu0 %v425
      %480 = vmatprep.subr.mxu0 0.0
      %481 = vmatpush1.msra.mxu0 %v426
      %482 = vmatprep.subr.mxu0 0.0
      %483 = vmatpush1.msra.mxu0 %v427
      %484 = vmatprep.subr.mxu0 0.0
      %485 = vmatpush1.msra.mxu0 %v428
      %486 = vmatprep.subr.mxu0 0.0
      %487 = vmatpush1.msra.mxu0 %v429
      %488 = vmatprep.subr.mxu0 0.0
      %489 = vmatpush1.msra.mxu0 %v430
      %490 = vmatprep.subr.mxu0 0.0
      %491 = vmatpush1.msra.mxu0 %v431
      %492 = vmatprep.subr.mxu0 0.0
      %493 = vmatpush1.msra.mxu0 %v432
      %494 = vmatprep.subr.mxu0 0.0
      %495 = vmatpush1.msra.mxu0 %v433
      %496 = vmatprep.subr.mxu0 0.0
      %497 = vmatpush1.msra.mxu0 %v434
      %498 = vmatprep.subr.mxu0 0.0
      %499 = vmatpush1.msra.mxu0 %v435
      %500 = vmatprep.subr.mxu0 0.0
      %501 = vmatpush1.msra.mxu0 %v436
      %502 = vmatprep.subr.mxu0 0.0
      %503 = vmatpush1.msra.mxu0 %v437
      %504 = vmatprep.subr.mxu0 0.0
      %505 = vmatpush1.msra.mxu0 %v438
      %506 = vmatprep.subr.mxu0 0.0
      %507 = vmatpush1.msra.mxu0 %v439
      %508 = vmatprep.subr.mxu0 0.0
      %509 = vmatpush1.msra.mxu0 %v440
      %510 = vmatprep.subr.mxu0 0.0
      %511 = vmatpush1.msra.mxu0 %v441
      %512 = vmatprep.subr.mxu0 0.0
      %513 = vmatpush1.msra.mxu0 %v442
      %514 = vmatprep.mubr.f32.mxu0 %v408
      %515 = vmatmul.mubr.f32.gmra.mrb[0].mxu0 %v407
      %v516 = vpop.f32.mrb[0].mxu0
      %v517 = vadd.f32 %v448, %v516
      %v518 = vpop.f32.mrb[0].mxu0
      %519 = vmatprep.mubr.f32.mxu0 %v410
      %520 = vmatmul.mubr.f32.gmra.mrb[0].mxu0 %v409
      %v521 = vpop.f32.mrb[0].mxu0
      %v522 = vadd.f32 %v448, %v521
      %v523 = vpop.f32.mrb[0].mxu0
      %524 = vdwg.mxu0
      %v525 = vmul.f32 %v284, %v517
      %v526 = vmul.f32 %v285, %v522
      %v527 = vld [vmem:[%s5] sm:$0xff]
      %v528 = vld [vmem:[%s5 + $0x8] sm:$0xff]
      %v529 = vld [vmem:[%s5 + $0x10] sm:$0xff]
      %v530 = vld [vmem:[%s5 + $0x18] sm:$0xff]
      %v531 = vld [vmem:[%s5 + $0x20] sm:$0xff]
      %v532 = vld [vmem:[%s5 + $0x28] sm:$0xff]
      %v533 = vld [vmem:[%s5 + $0x30] sm:$0xff]
      %v534 = vld [vmem:[%s5 + $0x38] sm:$0xff]
      %v535 = vld [vmem:[%s5 + $0x40] sm:$0xff]
      %v536 = vld [vmem:[%s5 + $0x48] sm:$0xff]
      %v537 = vld [vmem:[%s5 + $0x50] sm:$0xff]
      %v538 = vld [vmem:[%s5 + $0x58] sm:$0xff]
      %v539 = vld [vmem:[%s5 + $0x60] sm:$0xff]
      %v540 = vld [vmem:[%s5 + $0x68] sm:$0xff]
      %v541 = vld [vmem:[%s5 + $0x70] sm:$0xff]
      %v542 = vld [vmem:[%s5 + $0x78] sm:$0xff]
      %543 = vmatprep.subr.mxu0 0.0
      %544 = vmatpush1.msra.mxu0 %v527
      %545 = vmatprep.subr.mxu0 0.0
      %546 = vmatpush1.msra.mxu0 %v528
      %547 = vmatprep.subr.mxu0 0.0
      %548 = vmatpush1.msra.mxu0 %v529
      %549 = vmatprep.subr.mxu0 0.0
      %550 = vmatpush1.msra.mxu0 %v530
      %551 = vmatprep.subr.mxu0 0.0
      %552 = vmatpush1.msra.mxu0 %v531
      %553 = vmatprep.subr.mxu0 0.0
      %554 = vmatpush1.msra.mxu0 %v532
      %555 = vmatprep.subr.mxu0 0.0
      %556 = vmatpush1.msra.mxu0 %v533
      %557 = vmatprep.subr.mxu0 0.0
      %558 = vmatpush1.msra.mxu0 %v534
      %559 = vmatprep.subr.mxu0 0.0
      %560 = vmatpush1.msra.mxu0 %v535
      %561 = vmatprep.subr.mxu0 0.0
      %562 = vmatpush1.msra.mxu0 %v536
      %563 = vmatprep.subr.mxu0 0.0
      %564 = vmatpush1.msra.mxu0 %v537
      %565 = vmatprep.subr.mxu0 0.0
      %566 = vmatpush1.msra.mxu0 %v538
      %567 = vmatprep.subr.mxu0 0.0
      %568 = vmatpush1.msra.mxu0 %v539
      %569 = vmatprep.subr.mxu0 0.0
      %570 = vmatpush1.msra.mxu0 %v540
      %571 = vmatprep.subr.mxu0 0.0
      %572 = vmatpush1.msra.mxu0 %v541
      %573 = vmatprep.subr.mxu0 0.0
      %574 = vmatpush1.msra.mxu0 %v542
      %575 = vmatprep.subr.mxu0 0.0
      %576 = vmatpush1.msra.mxu0 0.0
      %577 = vmatprep.subr.mxu0 0.0
      %578 = vmatpush1.msra.mxu0 0.0
      %579 = vmatprep.subr.mxu0 0.0
      %580 = vmatpush1.msra.mxu0 0.0
      %581 = vmatprep.subr.mxu0 0.0
      %582 = vmatpush1.msra.mxu0 0.0
      %583 = vmatprep.subr.mxu0 0.0
      %584 = vmatpush1.msra.mxu0 0.0
      %585 = vmatprep.subr.mxu0 0.0
      %586 = vmatpush1.msra.mxu0 0.0
      %587 = vmatprep.subr.mxu0 0.0
      %588 = vmatpush1.msra.mxu0 0.0
      %589 = vmatprep.subr.mxu0 0.0
      %590 = vmatpush1.msra.mxu0 0.0
      %591 = vmatprep.subr.mxu0 0.0
      %592 = vmatpush1.msra.mxu0 0.0
      %593 = vmatprep.subr.mxu0 0.0
      %594 = vmatpush1.msra.mxu0 0.0
      %595 = vmatprep.subr.mxu0 0.0
      %596 = vmatpush1.msra.mxu0 0.0
      %597 = vmatprep.subr.mxu0 0.0
      %598 = vmatpush1.msra.mxu0 0.0
      %599 = vmatprep.subr.mxu0 0.0
      %600 = vmatpush1.msra.mxu0 0.0
      %601 = vmatprep.subr.mxu0 0.0
      %602 = vmatpush1.msra.mxu0 0.0
      %603 = vmatprep.subr.mxu0 0.0
      %604 = vmatpush1.msra.mxu0 0.0
      %605 = vmatprep.subr.mxu0 0.0
      %606 = vmatpush1.msra.mxu0 0.0
      %607 = vmatprep.mubr.f32.mxu0 0.0
      %608 = vmatmul.mubr.f32.gmra.mrb[0].mxu0 %v525
      %v609 = vpop.f32.mrb[0].mxu0
      %v610 = vadd.f32 0.0, %v609
      %v611 = vpop.f32.mrb[0].mxu0
      %612 = vmatprep.mubr.f32.mxu0 0.0
      %613 = vmatmul.mubr.f32.gmra.mrb[0].mxu0 %v526
      %v614 = vpop.f32.mrb[0].mxu0
      %v615 = vadd.f32 0.0, %v614
      %v616 = vpop.f32.mrb[0].mxu0
      %617 = vdwg.mxu0
      %v618 = vsub.f32 %v517, %v610
      %v619 = vsub.f32 %v522, %v615
      %v620 = vmul.f32 %v284, %v618
      %v621 = vmul.f32 %v285, %v619
      %v622 = vstv %s283
      %v623 = vmul.f32 %v622, %v517
      %v624 = vmul.f32 %v622, %v522
      %v625 = vadd.f32 %v620, %v623
      %v626 = vadd.f32 %v621, %v624
      %627 = vst [vmem:[%s281] sm:$0xff] %v625
      %628 = vst [vmem:[%s281 + $0x8] sm:$0xff] %v626
      %s629 = smul.u32 2, %s19
      %p630 = scmp.lt.s32.totalorder %s629, 7
      %s631 = scalar_select %p630, %s629, 7
      %s632 = smul.addr %s631, 8
      %s633 = scalar_lea.vmem %s7, %s632
      // Predicated region
      $region49: #{replicator_shallow_mlp.1} parent=47 // pred_check
        %p634 = pneg %p189
      $region50: #{replicator_shallow_mlp.1} parent=47 // pred_check_branch
        %636 = sbr.rel (%p634) target = $region52
      $region51: #{replicator_shallow_mlp.1} parent=47 // pred_region
        %s637 = smul.u32 2, %s19
      $region52: #{replicator_shallow_mlp.1} parent=47 // pred_fallthru
        _
    $region48: #{replicator_shallow_mlp.1} parent=5 // pred_fallthru
      _
    %p638 = scmp.le.s32.totalorder 2, %s14
    // Predicated region
    $region53: #{replicator_shallow_mlp.1} parent=5 // pred_check
      %p639 = pneg %p638
    $region54: #{replicator_shallow_mlp.1} parent=5 // pred_check_branch
      %641 = sbr.rel (%p639) target = $region56
    $region55: #{replicator_shallow_mlp.1} parent=5 // pred_region
      %s642 = ssub.s32 %s14, 2
      // Predicated region
      $region57: #{replicator_shallow_mlp.1} parent=55 // pred_check
        %p643 = pneg %p195
      $region58: #{replicator_shallow_mlp.1} parent=55 // pred_check_branch
        %645 = sbr.rel (%p643) target = $region60
      $region59: #{replicator_shallow_mlp.1} parent=55 // pred_region
        %s646 = smul.u32 2, %s20
        %p647 = scmp.lt.s32.totalorder %s646, 7
        %s648 = scalar_select %p647, %s646, 7
        %s649 = smul.addr %s648, 8
        %s650 = scalar_lea.vmem %s7, %s649
      $region60: #{replicator_shallow_mlp.1} parent=55 // pred_fallthru
        _
    $region56: #{replicator_shallow_mlp.1} parent=5 // pred_fallthru
      _
  $region6: #{replicator_shallow_mlp.1} parent=0 // loop_footer
    %s18 = sadd.s32 1, %s14
  $region7: #{replicator_shallow_mlp.1} parent=0 // loop_footer_branch
    %13 = sbr.rel target = $region3
  $region8: #{replicator_shallow_mlp.1} parent=0 // loop_exit
    _

</llo_original>
